<compile_context>
chip_gen: v7x
topology: tpu7x:2x2x1
jax: 0.10.0
libtpu: 0.0.40
codegen_flags: <defaults>
</compile_context>

<pallas_src>
import functools

import jax
import jax.numpy as jnp
from jax.experimental import pallas as pl
from jax.experimental.pallas import tpu as pltpu


def _round_up(x: int, m: int) -> int:
    return (x + m - 1) // m * m


# ---------------------------------------------------------------------------
# Path A: resident-table one-hot matmul (small vocab * embed).
# ---------------------------------------------------------------------------
def _embed_onehot_kernel(ids_ref, table_ref, out_ref):
    """out[t, :] = table[ids[t], :] via one_hot(T, V) @ table(V, E) on the MXU.

    ids_ref   : (T, 1)        int32 token ids for this token tile (VMEM)
    table_ref : (V_pad, E_pad) full padded table, VMEM resident (constant map)
    out_ref   : (T, E_pad)    lane-dense output tile
    """
    t = out_ref.shape[0]
    v = table_ref.shape[0]
    ids = ids_ref[...]                                       # (T, 1) int32
    iota = jax.lax.broadcasted_iota(jnp.int32, (t, v), 1)    # (T, V_pad)
    one_hot = (iota == ids).astype(table_ref.dtype)          # exact 0/1
    # f32 table: Mosaic lowers this as a native (multi-pass) f32 MXU matmul,
    # so the 0/1 selection is exact.  bf16 table: single-pass bf16 matmul.
    out_ref[...] = jnp.dot(
        one_hot, table_ref[...], preferred_element_type=jnp.float32
    ).astype(out_ref.dtype)


def _forward_resident_onehot(table, ids, token_tile, v_pad, e_pad):
    vocab, embed = table.shape
    dtype = table.dtype
    itemsize = jnp.dtype(dtype).itemsize
    n = ids.shape[0]

    # Token tile: as large as possible (fills the MXU LHS, amortizes the
    # ~0.35us/step overhead) but bounded so that 2x resident table + 2x output
    # tile stays comfortably under the explicit 32 MiB scoped-VMEM limit.
    table_bytes = v_pad * e_pad * itemsize
    budget = 24 * 1024 * 1024 - 2 * table_bytes
    max_rows = max(8, budget // (2 * e_pad * itemsize))
    t = min(token_tile, _round_up(n, 8), max_rows)
    t = max(8, (t // 8) * 8)
    n_pad = _round_up(n, t)

    ids_col = jnp.zeros((n_pad, 1), jnp.int32).at[:n, 0].set(ids)

    padded = table
    if (v_pad, e_pad) != (vocab, embed):
        padded = jnp.zeros((v_pad, e_pad), dtype).at[:vocab, :embed].set(table)

    # Table is fetched once (constant index_map), not once per token tile.
    cost = pl.CostEstimate(
        flops=int(2 * n_pad * v_pad * e_pad),
        transcendentals=0,
        bytes_accessed=int(v_pad * e_pad * itemsize
                           + n_pad * 4
                           + n_pad * e_pad * itemsize),
    )

    return pl.pallas_call(
        _embed_onehot_kernel,
        out_shape=jax.ShapeDtypeStruct((n_pad, e_pad), dtype),
        grid_spec=pltpu.PrefetchScalarGridSpec(
            num_scalar_prefetch=0,
            grid=(n_pad // t,),
            in_specs=[
                # Token ids for this tile.
                pl.BlockSpec((t, 1), lambda i: (i, 0)),
                # Whole padded table, constant block index -> VMEM resident.
                pl.BlockSpec((v_pad, e_pad), lambda i: (0, 0)),
            ],
            out_specs=pl.BlockSpec((t, e_pad), lambda i: (i, 0)),
        ),
        compiler_params=pltpu.CompilerParams(
            dimension_semantics=("parallel",),
            vmem_limit_bytes=32 * 1024 * 1024),
        cost_estimate=cost,
    )(ids_col, padded)


# ---------------------------------------------------------------------------
# Path B: HBM row gather via scalar-prefetched ids + per-row DMAs.
# ---------------------------------------------------------------------------
def _embed_gather_kernel(ids_ref, table_ref, out_ref, buf_ref, sem):
    """Gather T embedding rows from the HBM table into one output tile.

    ids_ref   : (N_pad,)  int32, SMEM (scalar prefetch)
    table_ref : (V, E)    table left in HBM (memory_space=pl.ANY)
    out_ref   : (T, E)    output tile (VMEM)
    buf_ref   : (T, E)    VMEM staging buffer (scratch)
    sem       : scalar DMA semaphore
    """
    rows = out_ref.shape[0]
    vocab = table_ref.shape[0]
    base = pl.program_id(0) * rows

    # Queue all T row DMAs back-to-back (deep DMA queue hides per-descriptor
    # latency), then drain.  All copies are the same size and share one sem.
    @pl.loop(0, rows)
    def _issue(j):
        row = ids_ref[base + j]
        row = jnp.clip(row, 0, vocab - 1)   # torch would raise on OOB ids
        pltpu.make_async_copy(
            table_ref.at[pl.ds(row, 1), :],
            buf_ref.at[pl.ds(j, 1), :],
            sem,
        ).start()

    @pl.loop(0, rows)
    def _drain(j):
        pltpu.make_async_copy(
            table_ref.at[pl.ds(0, 1), :],
            buf_ref.at[pl.ds(j, 1), :],
            sem,
        ).wait()

    out_ref[...] = buf_ref[...]


def _forward_hbm_gather(table, ids, token_tile):
    vocab, embed = table.shape
    dtype = table.dtype
    itemsize = jnp.dtype(dtype).itemsize
    n = ids.shape[0]

    t = min(token_tile, _round_up(n, 8))
    t = max(8, (t // 8) * 8)
    n_pad = _round_up(n, t)
    ids_pad = jnp.zeros((n_pad,), jnp.int32).at[:n].set(ids)

    cost = pl.CostEstimate(
        flops=0,
        transcendentals=0,
        bytes_accessed=int(n_pad * 4 + 2 * n_pad * embed * itemsize),
    )

    return pl.pallas_call(
        _embed_gather_kernel,
        out_shape=jax.ShapeDtypeStruct((n_pad, embed), dtype),
        grid_spec=pltpu.PrefetchScalarGridSpec(
            num_scalar_prefetch=1,              # ids -> SMEM
            grid=(n_pad // t,),
            in_specs=[pl.BlockSpec(memory_space=pl.ANY)],   # table stays in HBM
            out_specs=pl.BlockSpec((t, embed), lambda i, ids_ref: (i, 0)),
            scratch_shapes=[
                pltpu.VMEM((t, embed), dtype),
                pltpu.SemaphoreType.DMA(()),
            ],
        ),
        compiler_params=pltpu.CompilerParams(
            dimension_semantics=("parallel",)),
        cost_estimate=cost,
    )(ids_pad, table)


# ---------------------------------------------------------------------------
# Public wrapper: Word2Vec.forward
# ---------------------------------------------------------------------------
@functools.partial(jax.jit, static_argnames=("token_tile", "resident_table_bytes"))
def word2vec_forward(embedding_table: jax.Array,
                     x: jax.Array,
                     *,
                     token_tile: int = 256,
                     resident_table_bytes: int = 4 * 1024 * 1024) -> jax.Array:
    """Embedding lookup: returns embedding_table[x] with shape x.shape + (E,)."""
    vocab_size, embed_size = embedding_table.shape
    out_dtype = embedding_table.dtype
    orig_shape = x.shape

    ids = x.reshape(-1).astype(jnp.int32)
    n = ids.shape[0]
    if n == 0:                                   # degenerate empty input
        return jnp.zeros((*orig_shape, embed_size), dtype=out_dtype)

    itemsize = jnp.dtype(out_dtype).itemsize
    e_pad = _round_up(embed_size, 128)           # lane-dense embedding width
    v_pad = _round_up(vocab_size, 128)           # lane-dense one-hot / MXU K
    table_bytes = v_pad * e_pad * itemsize

    if table_bytes <= resident_table_bytes:
        out = _forward_resident_onehot(embedding_table, ids, token_tile,
                                       v_pad, e_pad)
        out = out[:n, :embed_size]
    else:
        out = _forward_hbm_gather(embedding_table, ids, token_tile)
        out = out[:n]
    return out.reshape(*orig_shape, embed_size)


if __name__ == "__main__":
    # Deterministic synthetic parameters (nn.Embedding default init is N(0,1));
    # no GloVe / checkpoint loading.
    key = jax.random.PRNGKey(0)
    k_table, k_idx, k_table2, k_idx2 = jax.random.split(key, 4)
    batch, seq = 2, 8

    # --- Case 1: small vocab -> resident-table one-hot MXU path. ---
    vocab_size, embed_size = 32, 128
    embedding_table = jax.random.normal(
        k_table, (vocab_size, embed_size), dtype=jnp.float32)
    x = jax.random.randint(k_idx, (batch, seq), 0, vocab_size, dtype=jnp.int32)

    y = word2vec_forward(embedding_table, x)
    jax.block_until_ready(y)
    y_ref = embedding_table[x]
    assert y.shape == (batch, seq, embed_size)
    assert y.dtype == y_ref.dtype
    assert jnp.allclose(y, y_ref)

    # --- Case 2: force the large-vocab HBM row-gather path (exact), with a
    # non-128-aligned embedding width. ---
    vocab2, embed2 = 1000, 96
    table2 = jax.random.normal(k_table2, (vocab2, embed2), dtype=jnp.float32)
    x2 = jax.random.randint(k_idx2, (batch, seq), 0, vocab2, dtype=jnp.int32)

    y2 = word2vec_forward(table2, x2, resident_table_bytes=0)
    jax.block_until_ready(y2)
    assert y2.shape == (batch, seq, embed2)
    assert jnp.array_equal(y2, table2[x2])

    print("KERNEL_OK")
</pallas_src>

<mosaic_0001>
module attributes {stable_mosaic.version = 11 : i64} {
  func.func @_embed_onehot_kernel(%arg0: i32, %arg1: memref<16x1xi32, #tpu.memory_space<vmem>>, %arg2: memref<128x128xf32, #tpu.memory_space<vmem>>, %arg3: memref<16x128xf32, #tpu.memory_space<vmem>>) attributes {dimension_semantics = [#tpu.dimension_semantics<parallel>], iteration_bounds = array<i64: 1>, scalar_prefetch = 0 : i64, scratch_operands = 0 : i64, tpu.core_type = #tpu.core_type<tc>, window_params = [{transform_indices = @transform_0, window_bounds = array<i64: 16, 1>}, {pipeline_mode = #tpu.pipeline_mode<synchronous>, transform_indices = @transform_1, window_bounds = array<i64: 128, 128>}, {transform_indices = @transform_2, window_bounds = array<i64: 16, 128>}]} {
    %c0 = arith.constant 0 : index
    %c0_0 = arith.constant 0 : index
    %0 = vector.load %arg1[%c0, %c0_0] : memref<16x1xi32, #tpu.memory_space<vmem>>, vector<16x1xi32>
    %1 = tpu.iota {dimensions = array<i32: 1>} : vector<16x128xi32>
    %2 = vector.broadcast %0 : vector<16x1xi32> to vector<16x128xi32>
    %3 = arith.cmpi eq, %1, %2 : vector<16x128xi32>
    %4 = arith.extui %3 : vector<16x128xi1> to vector<16x128xi32>
    %5 = arith.sitofp %4 : vector<16x128xi32> to vector<16x128xf32>
    %c0_1 = arith.constant 0 : index
    %c0_2 = arith.constant 0 : index
    %6 = vector.load %arg2[%c0_1, %c0_2] : memref<128x128xf32, #tpu.memory_space<vmem>>, vector<128x128xf32>
    %cst = arith.constant dense<0.000000e+00> : vector<16x128xf32>
    %7 = tpu.matmul %5, %6, %cst {dimension_numbers = #tpu.dot_dimension_numbers<[1], [0], [0], [1], [0, 0, 1, 1], [], []>} : vector<16x128xf32>, vector<128x128xf32>, vector<16x128xf32> -> vector<16x128xf32>
    %c0_3 = arith.constant 0 : index
    %c0_4 = arith.constant 0 : index
    %8 = vector.load %arg3[%c0_3, %c0_4] : memref<16x128xf32, #tpu.memory_space<vmem>>, vector<16x128xf32>
    tpu.vector_store %arg3[%c0_3, %c0_4], %7 {strides = array<i32>} : memref<16x128xf32, #tpu.memory_space<vmem>>, vector<16x128xf32>,
    return
  }
  func.func @transform_0(%arg0: i32) -> (i32, i32) {
    %c0_i32 = arith.constant 0 : i32
    %c0_i32_0 = arith.constant 0 : i32
    return %arg0, %c0_i32 : i32, i32
  }
  func.func @transform_1(%arg0: i32) -> (i32, i32) {
    %c0_i32 = arith.constant 0 : i32
    %c0_i32_0 = arith.constant 0 : i32
    %c0_i32_1 = arith.constant 0 : i32
    return %c0_i32, %c0_i32_0 : i32, i32
  }
  func.func @transform_2(%arg0: i32) -> (i32, i32) {
    %c0_i32 = arith.constant 0 : i32
    %c0_i32_0 = arith.constant 0 : i32
    return %arg0, %c0_i32 : i32, i32
  }
}

</mosaic_0001>

<llo_original>
// kernel: word2vec_forward.1
$region0: #{word2vec_forward.1}
  #allocation0 [shape = 'u32[]', space=smem, size = 0x4, offset = 0x4, fixed_abs, tag = 'smem constant byte address 0x4 - core index']
  #allocation1 [shape = 'u32[144,128]{1,0:T(1,128)}', space=vmem, size = 0x12000, scoped, tag = 'internal scratch']
  %s0 = inlined_call_operand.vmem [shape: s32[16,1], index: 0, kind: input, shape index: {}]
  %s1 = inlined_call_operand.vmem [shape: f32[128,128], index: 1, kind: input, shape index: {}]
  %s2 = inlined_call_operand.hbm [shape: f32[16,128], index: 2, kind: output, shape index: {}]
  %s3 = sld [smem:[#allocation0]]
  $region18: #{word2vec_forward.1} parent=0
    _
  %s5 = ssub.s32 1, %s3
  %s6 = scalar_select 0, %s5, %s3
  $region1: #{word2vec_forward.1} parent=0
    #allocation2 [shape = 'u8[8192]{0}', space=vmem, size = 0x2000, scoped, tag = 'output window, operand 0, single buffered']
    #allocation3 [shape = 's32[1]{0}', space=sflag, size = 0x4, scoped, tag = 'scoped memory for word2vec_forward.1']
    %7 = vsyncpa [#allocation3], 0
    // Predicated region
    $region2: #{word2vec_forward.1} parent=1 // pred_check
      _
    $region3: #{word2vec_forward.1} parent=1 // pred_check_branch
      %9 = sbr.rel (0) target = $region5
    $region4: #{word2vec_forward.1} parent=1 // pred_region
      _
    $region5: #{word2vec_forward.1} parent=1 // pred_fallthru
      _
    // Predicated region
    $region6: #{word2vec_forward.1} parent=1 // pred_check
      _
    $region7: #{word2vec_forward.1} parent=1 // pred_check_branch
      %11 = sbr.rel (0) target = $region9
    $region8: #{word2vec_forward.1} parent=1 // pred_region
      _
    $region9: #{word2vec_forward.1} parent=1 // pred_fallthru
      _
    %v12 = vld [vmem:[%s0] sm:$0xff]
    %v13 = vld [vmem:[%s0 + $0x8] sm:$0xff]
    %v14 = vlaneseq
    %v15 = vand.u32 %v14, 127
    %16 = vset.pattern.permute.xlu0 0
    %17 = vperm.xlu0 %16, %v12
    %v18 = vpop.permute.xlu0 %17
    %19 = vset.pattern.permute.xlu0 0
    %20 = vperm.xlu0 %19, %v13
    %v21 = vpop.permute.xlu0 %20
    %vm22 = vcmp.eq.s32.totalorder %v15, %v18
    %vm23 = vcmp.eq.s32.totalorder %v15, %v21
    %v24 = vsel %vm22, 1, 0
    %v25 = vsel %vm23, 1, 0
    %v26 = vcvt.s32.f32 %v24
    %v27 = vcvt.s32.f32 %v25
    %v28 = vld [vmem:[%s1] sm:$0xff]
    %v29 = vld [vmem:[%s1 + $0x8] sm:$0xff]
    %v30 = vld [vmem:[%s1 + $0x10] sm:$0xff]
    %v31 = vld [vmem:[%s1 + $0x18] sm:$0xff]
    %v32 = vld [vmem:[%s1 + $0x20] sm:$0xff]
    %v33 = vld [vmem:[%s1 + $0x28] sm:$0xff]
    %v34 = vld [vmem:[%s1 + $0x30] sm:$0xff]
    %v35 = vld [vmem:[%s1 + $0x38] sm:$0xff]
    %v36 = vld [vmem:[%s1 + $0x40] sm:$0xff]
    %v37 = vld [vmem:[%s1 + $0x48] sm:$0xff]
    %v38 = vld [vmem:[%s1 + $0x50] sm:$0xff]
    %v39 = vld [vmem:[%s1 + $0x58] sm:$0xff]
    %v40 = vld [vmem:[%s1 + $0x60] sm:$0xff]
    %v41 = vld [vmem:[%s1 + $0x68] sm:$0xff]
    %v42 = vld [vmem:[%s1 + $0x70] sm:$0xff]
    %v43 = vld [vmem:[%s1 + $0x78] sm:$0xff]
    %44 = vmatprep.subr.mxu0 0.0
    %45 = vmatpush1.msra.mxu0 %v28
    %46 = vmatprep.subr.mxu0 0.0
    %47 = vmatpush1.msra.mxu0 %v29
    %48 = vmatprep.subr.mxu0 0.0
    %49 = vmatpush1.msra.mxu0 %v30
    %50 = vmatprep.subr.mxu0 0.0
    %51 = vmatpush1.msra.mxu0 %v31
    %52 = vmatprep.subr.mxu0 0.0
    %53 = vmatpush1.msra.mxu0 %v32
    %54 = vmatprep.subr.mxu0 0.0
    %55 = vmatpush1.msra.mxu0 %v33
    %56 = vmatprep.subr.mxu0 0.0
    %57 = vmatpush1.msra.mxu0 %v34
    %58 = vmatprep.subr.mxu0 0.0
    %59 = vmatpush1.msra.mxu0 %v35
    %60 = vmatprep.subr.mxu0 0.0
    %61 = vmatpush1.msra.mxu0 %v36
    %62 = vmatprep.subr.mxu0 0.0
    %63 = vmatpush1.msra.mxu0 %v37
    %64 = vmatprep.subr.mxu0 0.0
    %65 = vmatpush1.msra.mxu0 %v38
    %66 = vmatprep.subr.mxu0 0.0
    %67 = vmatpush1.msra.mxu0 %v39
    %68 = vmatprep.subr.mxu0 0.0
    %69 = vmatpush1.msra.mxu0 %v40
    %70 = vmatprep.subr.mxu0 0.0
    %71 = vmatpush1.msra.mxu0 %v41
    %72 = vmatprep.subr.mxu0 0.0
    %73 = vmatpush1.msra.mxu0 %v42
    %74 = vmatprep.subr.mxu0 0.0
    %75 = vmatpush1.msra.mxu0 %v43
    %76 = vmatprep.subr.mxu0 0.0
    %77 = vmatpush1.msra.mxu0 0.0
    %78 = vmatprep.subr.mxu0 0.0
    %79 = vmatpush1.msra.mxu0 0.0
    %80 = vmatprep.subr.mxu0 0.0
    %81 = vmatpush1.msra.mxu0 0.0
    %82 = vmatprep.subr.mxu0 0.0
    %83 = vmatpush1.msra.mxu0 0.0
    %84 = vmatprep.subr.mxu0 0.0
    %85 = vmatpush1.msra.mxu0 0.0
    %86 = vmatprep.subr.mxu0 0.0
    %87 = vmatpush1.msra.mxu0 0.0
    %88 = vmatprep.subr.mxu0 0.0
    %89 = vmatpush1.msra.mxu0 0.0
    %90 = vmatprep.subr.mxu0 0.0
    %91 = vmatpush1.msra.mxu0 0.0
    %92 = vmatprep.subr.mxu0 0.0
    %93 = vmatpush1.msra.mxu0 0.0
    %94 = vmatprep.subr.mxu0 0.0
    %95 = vmatpush1.msra.mxu0 0.0
    %96 = vmatprep.subr.mxu0 0.0
    %97 = vmatpush1.msra.mxu0 0.0
    %98 = vmatprep.subr.mxu0 0.0
    %99 = vmatpush1.msra.mxu0 0.0
    %100 = vmatprep.subr.mxu0 0.0
    %101 = vmatpush1.msra.mxu0 0.0
    %102 = vmatprep.subr.mxu0 0.0
    %103 = vmatpush1.msra.mxu0 0.0
    %104 = vmatprep.subr.mxu0 0.0
    %105 = vmatpush1.msra.mxu0 0.0
    %106 = vmatprep.subr.mxu0 0.0
    %107 = vmatpush1.msra.mxu0 0.0
    %108 = vmatprep.mubr.f32.mxu0 0.0
    %109 = vmatmul.mubr.f32.gmra.mrb[0].mxu0 %v26
    %v110 = vpop.f32.mrb[0].mxu0
    %v111 = vadd.f32 0.0, %v110
    %v112 = vpop.f32.mrb[0].mxu0
    %113 = vmatprep.mubr.f32.mxu0 0.0
    %114 = vmatmul.mubr.f32.gmra.mrb[0].mxu0 %v27
    %v115 = vpop.f32.mrb[0].mxu0
    %v116 = vadd.f32 0.0, %v115
    %v117 = vpop.f32.mrb[0].mxu0
    %118 = vdwg.mxu0
    %119 = vst [vmem:[#allocation2] sm:$0xff] %v111
    %120 = vst [vmem:[#allocation2 + $0x8] sm:$0xff] %v116
    // Predicated region
    $region10: #{word2vec_forward.1} parent=1 // pred_check
      _
    $region11: #{word2vec_forward.1} parent=1 // pred_check_branch
      %122 = sbr.rel (0) target = $region13
    $region12: #{word2vec_forward.1} parent=1 // pred_region
      %s124 = ssub.s32 256, 256
      %125 = vsyncadd [#allocation3], %s124
      %s126 = sshll.u32 [#allocation2], 4
      %s127 = int_to_ptr.vmem [resolvable:$true] %s126
      %132 = dma.vmem_to_hbm [thread:$0]  %s127, 256, %s2, [#allocation3], 128, 128, 8
    $region13: #{word2vec_forward.1} parent=1 // pred_fallthru
      _
    // Predicated region
    $region14: #{word2vec_forward.1} parent=1 // pred_check
      _
    $region15: #{word2vec_forward.1} parent=1 // pred_check_branch
      %134 = sbr.rel (0) target = $region17
    $region16: #{word2vec_forward.1} parent=1 // pred_region
      %135 = dma.done [#allocation3], 256
    $region17: #{word2vec_forward.1} parent=1 // pred_fallthru
      _
    %136 = vsyncpa [#allocation3], 1

</llo_original>
